<compile_context>
chip_gen: v7x
topology: tpu7x:2x2x1
jax: 0.10.0
libtpu: 0.0.40
codegen_flags: <defaults>
</compile_context>

<pallas_src>
import jax
import jax.numpy as jnp
from jax import lax
from jax.experimental import pallas as pl
from jax.experimental.pallas import tpu as pltpu


def _downsample_kernel(xe_ref, xo_ref, wt_ref, b_ref, o_ref, xt_ref):
    # xe_ref: (C, (H_out+1)*W)  padded even rows 2h, flattened (h, w)
    # xo_ref: (C,  H_out   *W)  padded odd rows 2h+1, flattened (h, w)
    # wt_ref: (C, 3C)   Wt[co, k*C + ci] = torch_w[co, ci, k, 0]
    # b_ref:  (C, 1)
    # o_ref:  (C, H_out*W)   lane-flat output block (per batch element)
    # xt_ref: (3C, H_out*W)  VMEM scratch holding the stacked taps
    C, HW = o_ref.shape
    W = xe_ref.shape[1] - HW                      # (H_out+1)*W - H_out*W == W

    # Build the im2col operand in VMEM from contiguous slices (no HBM im2col).
    xt_ref[0:C, :] = xe_ref[:, 0:HW]              # tap k=0 -> padded rows 2h
    xt_ref[C:2 * C, :] = xo_ref[:, 0:HW]          # tap k=1 -> padded rows 2h+1
    xt_ref[2 * C:3 * C, :] = xe_ref[:, W:W + HW]  # tap k=2 -> padded rows 2h+2

    # Single fused K=3C matmul on the MXU, then bias + swish epilogue.
    acc = jnp.dot(wt_ref[...], xt_ref[...], preferred_element_type=jnp.float32)
    acc = acc + b_ref[...]                        # broadcast (C,1) over lanes
    o_ref[...] = (acc * jax.nn.sigmoid(acc)).astype(o_ref.dtype)


def fuse_conv_params(w_torch, b):
    """Fold PyTorch OIHW (C, C, 3, 1) weight into (C, 3C) and bias into (C, 1).

    Hoist this out of the per-step jitted path (weights are static across calls).
    """
    C = w_torch.shape[0]
    wt = jnp.transpose(w_torch[:, :, :, 0], (0, 2, 1)).reshape(C, 3 * C)
    return wt, b.reshape(C, 1)


def downsample_noise_level_fused(x_nchw, wt, b2):
    """x_nchw: (N, C, H, W) f32.  wt: (C, 3C) fused weight.  b2: (C, 1)."""
    N, C, H, W = x_nchw.shape
    H_out = (H + 1) // 2                 # = (H + 2*pad - k)//stride + 1
    HW = H_out * W
    EHW = (H_out + 1) * W

    # --- minimal glue (fused by XLA): pad H, split even/odd padded rows -----
    x_pad = jnp.pad(x_nchw, ((0, 0), (0, 0), (1, 1), (0, 0)))        # (N,C,H+2,W)
    xe = x_pad[:, :, 0:2 * H_out + 1:2, :].reshape(N, C, EHW)        # rows 2h
    xo = x_pad[:, :, 1:2 * H_out:2, :].reshape(N, C, HW)             # rows 2h+1

    out = pl.pallas_call(
        _downsample_kernel,
        out_shape=jax.ShapeDtypeStruct((N, C, HW), x_nchw.dtype),
        grid=(N,),
        in_specs=[
            pl.BlockSpec((None, C, EHW), lambda n: (n, 0, 0),
                         memory_space=pltpu.MemorySpace.VMEM),
            pl.BlockSpec((None, C, HW), lambda n: (n, 0, 0),
                         memory_space=pltpu.MemorySpace.VMEM),
            pl.BlockSpec((C, 3 * C), lambda n: (0, 0),
                         memory_space=pltpu.MemorySpace.VMEM),
            pl.BlockSpec((C, 1), lambda n: (0, 0),
                         memory_space=pltpu.MemorySpace.VMEM),
        ],
        out_specs=pl.BlockSpec((None, C, HW), lambda n: (n, 0, 0),
                               memory_space=pltpu.MemorySpace.VMEM),
        scratch_shapes=[pltpu.VMEM((3 * C, HW), jnp.float32)],
        compiler_params=pltpu.CompilerParams(
            dimension_semantics=("parallel",)),
        cost_estimate=pl.CostEstimate(
            flops=2 * (3 * C) * C * N * HW,
            transcendentals=N * C * HW,
            bytes_accessed=4 * (N * C * (EHW + HW) + C * 3 * C + C + N * C * HW),
        ),
    )(xe, xo, wt, b2)                                                # (N, C, HW)

    # Free reinterpretation (contiguous trailing dims) -> NCHW, no transpose.
    return out.reshape(N, C, H_out, W)


def downsample_noise_level(x_nchw, w_torch, b):
    """Convenience wrapper matching the PyTorch module signature."""
    wt, b2 = fuse_conv_params(w_torch, b)
    return downsample_noise_level_fused(x_nchw, wt, b2)


def _reference(x_nchw, w_torch, b):
    y = lax.conv_general_dilated(
        x_nchw, w_torch,
        window_strides=(2, 1),
        padding=((1, 1), (0, 0)),
        dimension_numbers=("NCHW", "OIHW", "NCHW"),
    ) + b[None, :, None, None]
    return y * jax.nn.sigmoid(y)


if __name__ == "__main__":
    key = jax.random.PRNGKey(0)
    kx, kw, kb = jax.random.split(key, 3)

    N, C, H, W = 2, 32, 16, 8          # noise_emb_dim = 32
    x = jax.random.normal(kx, (N, C, H, W), dtype=jnp.float32)

    # Deterministic PyTorch-style init: U(-bound, bound), bound = 1/sqrt(fan_in)
    fan_in = C * 3 * 1
    bound = 1.0 / (fan_in ** 0.5)
    w = jax.random.uniform(kw, (C, C, 3, 1), jnp.float32, -bound, bound)
    b = jax.random.uniform(kb, (C,), jnp.float32, -bound, bound)

    # Weight fusion hoisted out of the jitted per-call path (done once).
    wt, b2 = fuse_conv_params(w, b)

    fn = jax.jit(downsample_noise_level_fused)
    out = fn(x, wt, b2)
    out = jax.block_until_ready(out)

    ref = _reference(x, w, b)
    H_out = (H + 1) // 2
    assert out.shape == (N, C, H_out, W), out.shape
    assert jnp.allclose(out, ref, atol=1e-5, rtol=1e-5), float(jnp.max(jnp.abs(out - ref)))

    print("KERNEL_OK")
</pallas_src>

<mosaic_0001>
module attributes {stable_mosaic.version = 11 : i64} {
  func.func @_downsample_kernel(%arg0: i32, %arg1: memref<1x32x72xf32, #tpu.memory_space<vmem>>, %arg2: memref<1x32x64xf32, #tpu.memory_space<vmem>>, %arg3: memref<32x96xf32, #tpu.memory_space<vmem>>, %arg4: memref<32x1xf32, #tpu.memory_space<vmem>>, %arg5: memref<1x32x64xf32, #tpu.memory_space<vmem>>, %arg6: memref<96x64xf32, #tpu.memory_space<vmem>>) attributes {dimension_semantics = [#tpu.dimension_semantics<parallel>], iteration_bounds = array<i64: 2>, scalar_prefetch = 0 : i64, scratch_operands = 1 : i64, tpu.core_type = #tpu.core_type<tc>, window_params = [{transform_indices = @transform_0, window_bounds = array<i64: 1, 32, 72>}, {transform_indices = @transform_1, window_bounds = array<i64: 1, 32, 64>}, {pipeline_mode = #tpu.pipeline_mode<synchronous>, transform_indices = @transform_2, window_bounds = array<i64: 32, 96>}, {pipeline_mode = #tpu.pipeline_mode<synchronous>, transform_indices = @transform_3, window_bounds = array<i64: 32, 1>}, {transform_indices = @transform_4, window_bounds = array<i64: 1, 32, 64>}]} {
    %c0 = arith.constant 0 : index
    %c0_0 = arith.constant 0 : index
    %c0_1 = arith.constant 0 : index
    %0 = vector.load %arg1[%c0, %c0_0, %c0_1] : memref<1x32x72xf32, #tpu.memory_space<vmem>>, vector<1x32x64xf32>
    %1 = vector.shape_cast %0 : vector<1x32x64xf32> to vector<32x64xf32>
    %c0_2 = arith.constant 0 : index
    %c0_3 = arith.constant 0 : index
    %2 = vector.load %arg6[%c0_2, %c0_3] : memref<96x64xf32, #tpu.memory_space<vmem>>, vector<32x64xf32>
    tpu.vector_store %arg6[%c0_2, %c0_3], %1 {strides = array<i32>} : memref<96x64xf32, #tpu.memory_space<vmem>>, vector<32x64xf32>,
    %c0_4 = arith.constant 0 : index
    %c0_5 = arith.constant 0 : index
    %c0_6 = arith.constant 0 : index
    %3 = vector.load %arg2[%c0_4, %c0_5, %c0_6] : memref<1x32x64xf32, #tpu.memory_space<vmem>>, vector<1x32x64xf32>
    %4 = vector.shape_cast %3 : vector<1x32x64xf32> to vector<32x64xf32>
    %c32 = arith.constant 32 : index
    %c0_7 = arith.constant 0 : index
    %5 = vector.load %arg6[%c32, %c0_7] : memref<96x64xf32, #tpu.memory_space<vmem>>, vector<32x64xf32>
    tpu.vector_store %arg6[%c32, %c0_7], %4 {strides = array<i32>} : memref<96x64xf32, #tpu.memory_space<vmem>>, vector<32x64xf32>,
    %c0_8 = arith.constant 0 : index
    %c0_9 = arith.constant 0 : index
    %c8 = arith.constant 8 : index
    %6 = vector.load %arg1[%c0_8, %c0_9, %c8] : memref<1x32x72xf32, #tpu.memory_space<vmem>>, vector<1x32x64xf32>
    %7 = vector.shape_cast %6 : vector<1x32x64xf32> to vector<32x64xf32>
    %c64 = arith.constant 64 : index
    %c0_10 = arith.constant 0 : index
    %8 = vector.load %arg6[%c64, %c0_10] : memref<96x64xf32, #tpu.memory_space<vmem>>, vector<32x64xf32>
    tpu.vector_store %arg6[%c64, %c0_10], %7 {strides = array<i32>} : memref<96x64xf32, #tpu.memory_space<vmem>>, vector<32x64xf32>,
    %c0_11 = arith.constant 0 : index
    %c0_12 = arith.constant 0 : index
    %9 = vector.load %arg3[%c0_11, %c0_12] : memref<32x96xf32, #tpu.memory_space<vmem>>, vector<32x96xf32>
    %c0_13 = arith.constant 0 : index
    %c0_14 = arith.constant 0 : index
    %10 = vector.load %arg6[%c0_13, %c0_14] : memref<96x64xf32, #tpu.memory_space<vmem>>, vector<96x64xf32>
    %cst = arith.constant dense<0.000000e+00> : vector<32x64xf32>
    %11 = tpu.matmul %9, %10, %cst {dimension_numbers = #tpu.dot_dimension_numbers<[1], [0], [0], [1], [0, 0, 1, 1], [], []>} : vector<32x96xf32>, vector<96x64xf32>, vector<32x64xf32> -> vector<32x64xf32>
    %c0_15 = arith.constant 0 : index
    %c0_16 = arith.constant 0 : index
    %12 = vector.load %arg4[%c0_15, %c0_16] : memref<32x1xf32, #tpu.memory_space<vmem>>, vector<32x1xf32>
    %13 = vector.broadcast %12 : vector<32x1xf32> to vector<32x64xf32>
    %14 = arith.addf %11, %13 : vector<32x64xf32>
    %15 = arith.negf %14 : vector<32x64xf32>
    %16 = math.exp %15 : vector<32x64xf32>
    %cst_17 = arith.constant 1.000000e+00 : f32
    %17 = vector.broadcast %cst_17 : f32 to vector<32x64xf32>
    %18 = arith.addf %17, %16 : vector<32x64xf32>
    %19 = arith.divf %17, %18 : vector<32x64xf32>
    %20 = arith.mulf %14, %19 : vector<32x64xf32>
    %c0_18 = arith.constant 0 : index
    %c0_19 = arith.constant 0 : index
    %c0_20 = arith.constant 0 : index
    %21 = vector.load %arg5[%c0_18, %c0_19, %c0_20] : memref<1x32x64xf32, #tpu.memory_space<vmem>>, vector<1x32x64xf32>
    %22 = vector.shape_cast %21 : vector<1x32x64xf32> to vector<32x64xf32>
    %23 = vector.shape_cast %20 : vector<32x64xf32> to vector<1x32x64xf32>
    tpu.vector_store %arg5[%c0_18, %c0_19, %c0_20], %23 {strides = array<i32>} : memref<1x32x64xf32, #tpu.memory_space<vmem>>, vector<1x32x64xf32>,
    return
  }
  func.func @transform_0(%arg0: i32) -> (i32, i32, i32) {
    %c0_i32 = arith.constant 0 : i32
    %c0_i32_0 = arith.constant 0 : i32
    %c0_i32_1 = arith.constant 0 : i32
    return %arg0, %c0_i32, %c0_i32_0 : i32, i32, i32
  }
  func.func @transform_1(%arg0: i32) -> (i32, i32, i32) {
    %c0_i32 = arith.constant 0 : i32
    %c0_i32_0 = arith.constant 0 : i32
    %c0_i32_1 = arith.constant 0 : i32
    return %arg0, %c0_i32, %c0_i32_0 : i32, i32, i32
  }
  func.func @transform_2(%arg0: i32) -> (i32, i32) {
    %c0_i32 = arith.constant 0 : i32
    %c0_i32_0 = arith.constant 0 : i32
    %c0_i32_1 = arith.constant 0 : i32
    return %c0_i32, %c0_i32_0 : i32, i32
  }
  func.func @transform_3(%arg0: i32) -> (i32, i32) {
    %c0_i32 = arith.constant 0 : i32
    %c0_i32_0 = arith.constant 0 : i32
    %c0_i32_1 = arith.constant 0 : i32
    return %c0_i32, %c0_i32_0 : i32, i32
  }
  func.func @transform_4(%arg0: i32) -> (i32, i32, i32) {
    %c0_i32 = arith.constant 0 : i32
    %c0_i32_0 = arith.constant 0 : i32
    %c0_i32_1 = arith.constant 0 : i32
    return %arg0, %c0_i32, %c0_i32_0 : i32, i32, i32
  }
}

</mosaic_0001>

<llo_original>
// kernel: downsample_noise_level_fused.1
$region0: #{downsample_noise_level_fused.1}
  #allocation0 [shape = 'u32[]', space=smem, size = 0x4, offset = 0x4, fixed_abs, tag = 'smem constant byte address 0x4 - core index']
  #allocation1 [shape = 'u32[144,128]{1,0:T(1,128)}', space=vmem, size = 0x12000, scoped, tag = 'internal scratch']
  #allocation2 [shape = 'f32[96,64]{1,0:T(8,128)}', space=vmem, size = 0xc000, scoped, tag = 'scratch operand']
  %s0 = inlined_call_operand.vmem [shape: f32[2,32,72], index: 0, kind: input, shape index: {}]
  %s1 = inlined_call_operand.vmem [shape: f32[2,32,64], index: 1, kind: input, shape index: {}]
  %s2 = inlined_call_operand.vmem [shape: f32[32,96], index: 2, kind: input, shape index: {}]
  %s3 = inlined_call_operand.vmem [shape: f32[32,1], index: 3, kind: input, shape index: {}]
  %s4 = inlined_call_operand.vmem [shape: f32[2,32,64], index: 4, kind: output, shape index: {}]
  %s5 = sld [smem:[#allocation0]]
  $region49: #{downsample_noise_level_fused.1} parent=0
    _
  %s7 = ssub.s32 1, %s5
  %s8 = scalar_select 0, %s7, %s5
  loop: start=0, step=1, limit=4
  $region2: #{downsample_noise_level_fused.1} parent=0 // loop_pre_header
    _
  $region3: #{downsample_noise_level_fused.1} parent=0 // loop_header
    %s10 = sphi 0, %s14
    %p11 = scmp.ge.s32.totalorder %s10, 4
    %s20 = sphi 0, %s22
    %s23 = sphi 0, %s20
    %s24 = sphi 0, %s23
    %s40 = sphi 0, %s24
    %s46 = sphi 0, %s48
    %s49 = sphi 0, %s46
    %s50 = sphi 0, %s49
    %s66 = sphi 0, %s50
    %s70 = sphi 0, %s70
    %s72 = sphi 0, %s70
    %s73 = sphi 0, %s72
    %s87 = sphi 0, %s73
    %s91 = sphi 0, %s91
    %s93 = sphi 0, %s91
    %s94 = sphi 0, %s93
    %s108 = sphi 0, %s94
    %s114 = sphi 0, %s116
    %s117 = sphi 0, %s114
    %s118 = sphi 0, %s117
    %s134 = sphi 0, %s118
  $region4: #{downsample_noise_level_fused.1} parent=0 // loop_header_branch
    %13 = sbr.rel (%p11) target = $region8
  $region5: #{downsample_noise_level_fused.1} parent=0 // loop_body
    %s15 = ssub.s32 %s10, 1
    %s16 = ssub.s32 %s10, 2
    %s17 = sadd.s32 %s10, 1
    %s18 = ssub.s32 %s10, %s17
    %p19 = scmp.eq.s32.totalorder %s18, 0
    %s21 = sadd.s32 %s20, 1
    %s22 = scalar_select %p19, %s20, %s21
    %p25 = pneg %p19
    %p26 = scmp.eq.s32.totalorder %s10, 1
    %p27 = por %p25, %p26
    %p28 = scmp.ne.s32.totalorder %s20, %s23
    %p29 = scmp.eq.s32.totalorder %s10, 0
    %p30 = por %p28, %p29
    %p31 = scmp.ne.s32.totalorder %s20, %s23
    %p32 = scmp.eq.s32.totalorder %s15, 1
    %p33 = por %p31, %p32
    %p34 = scmp.ne.s32.totalorder %s23, %s24
    %p35 = scmp.eq.s32.totalorder %s15, 0
    %p36 = por %p34, %p35
    %p37 = scmp.ne.s32.totalorder %s23, %s24
    %p38 = scmp.eq.s32.totalorder %s16, 1
    %p39 = por %p37, %p38
    %p41 = scmp.ne.s32.totalorder %s24, %s40
    %p42 = scmp.eq.s32.totalorder %s16, 0
    %p43 = por %p41, %p42
    %s44 = ssub.s32 %s10, %s17
    %p45 = scmp.eq.s32.totalorder %s44, 0
    %s47 = sadd.s32 %s46, 1
    %s48 = scalar_select %p45, %s46, %s47
    %p51 = pneg %p45
    %p52 = scmp.eq.s32.totalorder %s10, 1
    %p53 = por %p51, %p52
    %p54 = scmp.ne.s32.totalorder %s46, %s49
    %p55 = scmp.eq.s32.totalorder %s10, 0
    %p56 = por %p54, %p55
    %p57 = scmp.ne.s32.totalorder %s46, %s49
    %p58 = scmp.eq.s32.totalorder %s15, 1
    %p59 = por %p57, %p58
    %p60 = scmp.ne.s32.totalorder %s49, %s50
    %p61 = scmp.eq.s32.totalorder %s15, 0
    %p62 = por %p60, %p61
    %p63 = scmp.ne.s32.totalorder %s49, %s50
    %p64 = scmp.eq.s32.totalorder %s16, 1
    %p65 = por %p63, %p64
    %p67 = scmp.ne.s32.totalorder %s50, %s66
    %p68 = scmp.eq.s32.totalorder %s16, 0
    %p69 = por %p67, %p68
    %s71 = sadd.s32 %s70, 1
    %p74 = scmp.eq.s32.totalorder %s10, 1
    %p75 = scmp.ne.s32.totalorder %s70, %s72
    %p76 = scmp.eq.s32.totalorder %s10, 0
    %p77 = por %p75, %p76
    %p78 = scmp.ne.s32.totalorder %s70, %s72
    %p79 = scmp.eq.s32.totalorder %s15, 1
    %p80 = por %p78, %p79
    %p81 = scmp.ne.s32.totalorder %s72, %s73
    %p82 = scmp.eq.s32.totalorder %s15, 0
    %p83 = por %p81, %p82
    %p84 = scmp.ne.s32.totalorder %s72, %s73
    %p85 = scmp.eq.s32.totalorder %s16, 1
    %p86 = por %p84, %p85
    %p88 = scmp.ne.s32.totalorder %s73, %s87
    %p89 = scmp.eq.s32.totalorder %s16, 0
    %p90 = por %p88, %p89
    %s92 = sadd.s32 %s91, 1
    %p95 = scmp.eq.s32.totalorder %s10, 1
    %p96 = scmp.ne.s32.totalorder %s91, %s93
    %p97 = scmp.eq.s32.totalorder %s10, 0
    %p98 = por %p96, %p97
    %p99 = scmp.ne.s32.totalorder %s91, %s93
    %p100 = scmp.eq.s32.totalorder %s15, 1
    %p101 = por %p99, %p100
    %p102 = scmp.ne.s32.totalorder %s93, %s94
    %p103 = scmp.eq.s32.totalorder %s15, 0
    %p104 = por %p102, %p103
    %p105 = scmp.ne.s32.totalorder %s93, %s94
    %p106 = scmp.eq.s32.totalorder %s16, 1
    %p107 = por %p105, %p106
    %p109 = scmp.ne.s32.totalorder %s94, %s108
    %p110 = scmp.eq.s32.totalorder %s16, 0
    %p111 = por %p109, %p110
    %s112 = ssub.s32 %s10, %s17
    %p113 = scmp.eq.s32.totalorder %s112, 0
    %s115 = sadd.s32 %s114, 1
    %s116 = scalar_select %p113, %s114, %s115
    %p119 = pneg %p113
    %p120 = scmp.eq.s32.totalorder %s10, 1
    %p121 = por %p119, %p120
    %p122 = scmp.ne.s32.totalorder %s114, %s117
    %p123 = scmp.eq.s32.totalorder %s10, 0
    %p124 = por %p122, %p123
    %p125 = scmp.ne.s32.totalorder %s114, %s117
    %p126 = scmp.eq.s32.totalorder %s15, 1
    %p127 = por %p125, %p126
    %p128 = scmp.ne.s32.totalorder %s117, %s118
    %p129 = scmp.eq.s32.totalorder %s15, 0
    %p130 = por %p128, %p129
    %p131 = scmp.ne.s32.totalorder %s117, %s118
    %p132 = scmp.eq.s32.totalorder %s16, 1
    %p133 = por %p131, %p132
    %p135 = scmp.ne.s32.totalorder %s118, %s134
    %p136 = scmp.eq.s32.totalorder %s16, 0
    %p137 = por %p135, %p136
    %p138 = scmp.le.s32.totalorder 1, %s10
    %p139 = scmp.lt.s32.totalorder %s10, 3
    %p140 = pnand %p138, %p139
    %p141 = pneg %p140
    // Predicated region
    $region9: #{downsample_noise_level_fused.1} parent=5 // pred_check
      _
    $region10: #{downsample_noise_level_fused.1} parent=5 // pred_check_branch
      %143 = sbr.rel (%p140) target = $region12
    $region11: #{downsample_noise_level_fused.1} parent=5 // pred_region
      %s144 = ssub.s32 %s10, 1
      // Predicated region
      $region13: #{downsample_noise_level_fused.1} parent=11 // pred_check
        %p145 = pneg %p83
      $region14: #{downsample_noise_level_fused.1} parent=11 // pred_check_branch
        %147 = sbr.rel (%p145) target = $region16
      $region15: #{downsample_noise_level_fused.1} parent=11 // pred_region
        _
      $region16: #{downsample_noise_level_fused.1} parent=11 // pred_fallthru
        _
      // Predicated region
      $region17: #{downsample_noise_level_fused.1} parent=11 // pred_check
        %p148 = pneg %p104
      $region18: #{downsample_noise_level_fused.1} parent=11 // pred_check_branch
        %150 = sbr.rel (%p148) target = $region20
      $region19: #{downsample_noise_level_fused.1} parent=11 // pred_region
        _
      $region20: #{downsample_noise_level_fused.1} parent=11 // pred_fallthru
        _
    $region12: #{downsample_noise_level_fused.1} parent=5 // pred_fallthru
      _
    %p151 = scmp.lt.s32.totalorder %s10, 2
    // Predicated region
    $region21: #{downsample_noise_level_fused.1} parent=5 // pred_check
      %p152 = pneg %p151
    $region22: #{downsample_noise_level_fused.1} parent=5 // pred_check_branch
      %154 = sbr.rel (%p152) target = $region24
    $region23: #{downsample_noise_level_fused.1} parent=5 // pred_region
      // Predicated region
      $region25: #{downsample_noise_level_fused.1} parent=23 // pred_check
        %p155 = pneg %p30
      $region26: #{downsample_noise_level_fused.1} parent=23 // pred_check_branch
        %157 = sbr.rel (%p155) target = $region28
      $region27: #{downsample_noise_level_fused.1} parent=23 // pred_region
        %p158 = scmp.lt.s32.totalorder %s10, 1
        %s159 = scalar_select %p158, %s10, 1
        %s160 = smul.addr %s159, 4
        %s161 = smul.addr %s160, 8
        %s162 = scalar_lea.vmem %s0, %s161
      $region28: #{downsample_noise_level_fused.1} parent=23 // pred_fallthru
        _
      // Predicated region
      $region29: #{downsample_noise_level_fused.1} parent=23 // pred_check
        %p163 = pneg %p56
      $region30: #{downsample_noise_level_fused.1} parent=23 // pred_check_branch
        %165 = sbr.rel (%p163) target = $region32
      $region31: #{downsample_noise_level_fused.1} parent=23 // pred_region
        %p166 = scmp.lt.s32.totalorder %s10, 1
        %s167 = scalar_select %p166, %s10, 1
        %s168 = smul.addr %s167, 4
        %s169 = smul.addr %s168, 8
        %s170 = scalar_lea.vmem %s1, %s169
      $region32: #{downsample_noise_level_fused.1} parent=23 // pred_fallthru
        _
    $region24: #{downsample_noise_level_fused.1} parent=5 // pred_fallthru
      _
    %p171 = scmp.le.s32.totalorder 1, %s10
    %p172 = scmp.lt.s32.totalorder %s10, 3
    %p173 = pnand %p171, %p172
    %p174 = pneg %p173
    // Predicated region
    $region33: #{downsample_noise_level_fused.1} parent=5 // pred_check
      _
    $region34: #{downsample_noise_level_fused.1} parent=5 // pred_check_branch
      %176 = sbr.rel (%p173) target = $region36
    $region35: #{downsample_noise_level_fused.1} parent=5 // pred_region
      %s177 = ssub.s32 %s10, 1
      %p178 = scmp.lt.s32.totalorder %s15, 1
      %s179 = scalar_select %p178, %s15, 1
      %s180 = smul.addr %s179, 4
      %s181 = smul.addr %s180, 8
      %s182 = scalar_lea.vmem %s0, %s181
      %p183 = pneg %p36
      %p184 = pneg %p33
      %p185 = scmp.lt.s32.totalorder %s15, 1
      %s186 = scalar_select %p185, %s15, 1
      %s187 = smul.addr %s186, 4
      %s188 = smul.addr %s187, 8
      %s189 = scalar_lea.vmem %s1, %s188
      %p190 = pneg %p62
      %p191 = pneg %p59
      %p192 = pneg %p83
      %p193 = pneg %p80
      %p194 = pneg %p104
      %p195 = pneg %p101
      %p196 = pneg %p130
      %p197 = pneg %p127
      %p198 = scmp.lt.s32.totalorder %s15, 1
      %s199 = scalar_select %p198, %s15, 1
      %s200 = smul.addr %s199, 4
      %s201 = smul.addr %s200, 8
      %s202 = scalar_lea.vmem %s4, %s201
      %p203 = scmp.lt.s32.totalorder %s15, 1
      %s204 = scalar_select %p203, %s15, 1
      %s205 = smul.addr %s204, 4
      %s206 = smul.addr %s205, 8
      %s207 = scalar_lea.vmem %s0, %s206
      %p208 = scmp.lt.s32.totalorder %s15, 1
      %s209 = scalar_select %p208, %s15, 1
      %s210 = smul.addr %s209, 4
      %s211 = smul.addr %s210, 8
      %s212 = scalar_lea.vmem %s1, %s211
      %p213 = scmp.lt.s32.totalorder %s15, 1
      %s214 = scalar_select %p213, %s15, 1
      %s215 = smul.addr %s214, 4
      %s216 = smul.addr %s215, 8
      %s217 = scalar_lea.vmem %s4, %s216
      %v218 = vld [vmem:[%s207] sm:$0xff]
      %v219 = vld [vmem:[%s207 + $0x8] sm:$0xff]
      %v220 = vld [vmem:[%s207 + $0x10] sm:$0xff]
      %v221 = vld [vmem:[%s207 + $0x18] sm:$0xff]
      %vm222 = vcmask 523264
      %223 = vst.msk [vmem:[#allocation2] sm:$0xff] %vm222, %v218
      %224 = vst.msk [vmem:[#allocation2 + $0x8] sm:$0xff] %vm222, %v219
      %225 = vst.msk [vmem:[#allocation2 + $0x10] sm:$0xff] %vm222, %v220
      %226 = vst.msk [vmem:[#allocation2 + $0x18] sm:$0xff] %vm222, %v221
      %v227 = vld [vmem:[%s212] sm:$0xff]
      %v228 = vld [vmem:[%s212 + $0x8] sm:$0xff]
      %v229 = vld [vmem:[%s212 + $0x10] sm:$0xff]
      %v230 = vld [vmem:[%s212 + $0x18] sm:$0xff]
      %231 = vst.msk [vmem:[#allocation2 + $0x20] sm:$0xff] %vm222, %v227
      %232 = vst.msk [vmem:[#allocation2 + $0x28] sm:$0xff] %vm222, %v228
      %233 = vst.msk [vmem:[#allocation2 + $0x30] sm:$0xff] %vm222, %v229
      %234 = vst.msk [vmem:[#allocation2 + $0x38] sm:$0xff] %vm222, %v230
      %v235 = vld [vmem:[%s207] sm:$0xff]
      %v236 = vld [vmem:[%s207 + $0x8] sm:$0xff]
      %v237 = vld [vmem:[%s207 + $0x10] sm:$0xff]
      %v238 = vld [vmem:[%s207 + $0x18] sm:$0xff]
      %243 = vrot.lane.b32.xlu0 %v235, 120
      %v244 = vpop.permute.xlu0 %243
      %245 = vrot.lane.b32.xlu0 %v236, 120
      %v246 = vpop.permute.xlu0 %245
      %247 = vrot.lane.b32.xlu0 %v237, 120
      %v248 = vpop.permute.xlu0 %247
      %249 = vrot.lane.b32.xlu0 %v238, 120
      %v250 = vpop.permute.xlu0 %249
      %255 = vst.msk [vmem:[#allocation2 + $0x40] sm:$0xff] %vm222, %v244
      %256 = vst.msk [vmem:[#allocation2 + $0x48] sm:$0xff] %vm222, %v246
      %257 = vst.msk [vmem:[#allocation2 + $0x50] sm:$0xff] %vm222, %v248
      %258 = vst.msk [vmem:[#allocation2 + $0x58] sm:$0xff] %vm222, %v250
      %v259 = vld [vmem:[%s2] sm:$0xff]
      %v260 = vld [vmem:[%s2 + $0x8] sm:$0xff]
      %v261 = vld [vmem:[%s2 + $0x10] sm:$0xff]
      %v262 = vld [vmem:[%s2 + $0x18] sm:$0xff]
      %v263 = vld [vmem:[#allocation2] sm:$0xff]
      %v264 = vld [vmem:[#allocation2 + $0x8] sm:$0xff]
      %v265 = vld [vmem:[#allocation2 + $0x10] sm:$0xff]
      %v266 = vld [vmem:[#allocation2 + $0x18] sm:$0xff]
      %v267 = vld [vmem:[#allocation2 + $0x20] sm:$0xff]
      %v268 = vld [vmem:[#allocation2 + $0x28] sm:$0xff]
      %v269 = vld [vmem:[#allocation2 + $0x30] sm:$0xff]
      %v270 = vld [vmem:[#allocation2 + $0x38] sm:$0xff]
      %v271 = vld [vmem:[#allocation2 + $0x40] sm:$0xff]
      %v272 = vld [vmem:[#allocation2 + $0x48] sm:$0xff]
      %v273 = vld [vmem:[#allocation2 + $0x50] sm:$0xff]
      %v274 = vld [vmem:[#allocation2 + $0x58] sm:$0xff]
      %v275 = vld [vmem:[%s3] sm:$0xff]
      %v276 = vld [vmem:[%s3 + $0x8] sm:$0xff]
      %v277 = vld [vmem:[%s3 + $0x10] sm:$0xff]
      %v278 = vld [vmem:[%s3 + $0x18] sm:$0xff]
      %280 = vset.pattern.permute.xlu0 0
      %281 = vperm.xlu0 %280, %v275
      %v282 = vpop.permute.xlu0 %281
      %285 = vset.pattern.permute.xlu0 0
      %286 = vperm.xlu0 %285, %v276
      %v287 = vpop.permute.xlu0 %286
      %290 = vset.pattern.permute.xlu0 0
      %291 = vperm.xlu0 %290, %v277
      %v292 = vpop.permute.xlu0 %291
      %295 = vset.pattern.permute.xlu0 0
      %296 = vperm.xlu0 %295, %v278
      %v297 = vpop.permute.xlu0 %296
      %vm299 = vcmask 785408
      %v301 = vsel %vm299, %v259, 0
      %v304 = vsel %vm299, %v260, 0
      %v307 = vsel %vm299, %v261, 0
      %v310 = vsel %vm299, %v262, 0
      %312 = vmatprep.subr.mxu0 0.0
      %313 = vmatpush1.msra.mxu0 %v263
      %314 = vmatprep.subr.mxu0 0.0
      %315 = vmatpush1.msra.mxu0 %v264
      %316 = vmatprep.subr.mxu0 0.0
      %317 = vmatpush1.msra.mxu0 %v265
      %318 = vmatprep.subr.mxu0 0.0
      %319 = vmatpush1.msra.mxu0 %v266
      %320 = vmatprep.subr.mxu0 0.0
      %321 = vmatpush1.msra.mxu0 %v267
      %322 = vmatprep.subr.mxu0 0.0
      %323 = vmatpush1.msra.mxu0 %v268
      %324 = vmatprep.subr.mxu0 0.0
      %325 = vmatpush1.msra.mxu0 %v269
      %326 = vmatprep.subr.mxu0 0.0
      %327 = vmatpush1.msra.mxu0 %v270
      %328 = vmatprep.subr.mxu0 0.0
      %329 = vmatpush1.msra.mxu0 %v271
      %330 = vmatprep.subr.mxu0 0.0
      %331 = vmatpush1.msra.mxu0 %v272
      %332 = vmatprep.subr.mxu0 0.0
      %333 = vmatpush1.msra.mxu0 %v273
      %334 = vmatprep.subr.mxu0 0.0
      %335 = vmatpush1.msra.mxu0 %v274
      %336 = vmatprep.subr.mxu0 0.0
      %337 = vmatpush1.msra.mxu0 0.0
      %338 = vmatprep.subr.mxu0 0.0
      %339 = vmatpush1.msra.mxu0 0.0
      %340 = vmatprep.subr.mxu0 0.0
      %341 = vmatpush1.msra.mxu0 0.0
      %342 = vmatprep.subr.mxu0 0.0
      %343 = vmatpush1.msra.mxu0 0.0
      %344 = vmatprep.subr.mxu0 0.0
      %345 = vmatpush1.msra.mxu0 0.0
      %346 = vmatprep.subr.mxu0 0.0
      %347 = vmatpush1.msra.mxu0 0.0
      %348 = vmatprep.subr.mxu0 0.0
      %349 = vmatpush1.msra.mxu0 0.0
      %350 = vmatprep.subr.mxu0 0.0
      %351 = vmatpush1.msra.mxu0 0.0
      %352 = vmatprep.subr.mxu0 0.0
      %353 = vmatpush1.msra.mxu0 0.0
      %354 = vmatprep.subr.mxu0 0.0
      %355 = vmatpush1.msra.mxu0 0.0
      %356 = vmatprep.subr.mxu0 0.0
      %357 = vmatpush1.msra.mxu0 0.0
      %358 = vmatprep.subr.mxu0 0.0
      %359 = vmatpush1.msra.mxu0 0.0
      %360 = vmatprep.subr.mxu0 0.0
      %361 = vmatpush1.msra.mxu0 0.0
      %362 = vmatprep.subr.mxu0 0.0
      %363 = vmatpush1.msra.mxu0 0.0
      %364 = vmatprep.subr.mxu0 0.0
      %365 = vmatpush1.msra.mxu0 0.0
      %366 = vmatprep.subr.mxu0 0.0
      %367 = vmatpush1.msra.mxu0 0.0
      %368 = vmatprep.subr.mxu0 0.0
      %369 = vmatpush1.msra.mxu0 0.0
      %370 = vmatprep.subr.mxu0 0.0
      %371 = vmatpush1.msra.mxu0 0.0
      %372 = vmatprep.subr.mxu0 0.0
      %373 = vmatpush1.msra.mxu0 0.0
      %374 = vmatprep.subr.mxu0 0.0
      %375 = vmatpush1.msra.mxu0 0.0
      %376 = vmatprep.mubr.f32.mxu0 0.0
      %377 = vmatmul.mubr.f32.gmra.mrb[0].mxu0 %v301
      %v378 = vpop.f32.mrb[0].mxu0
      %v379 = vadd.f32 %v282, %v378
      %v380 = vpop.f32.mrb[0].mxu0
      %381 = vmatprep.mubr.f32.mxu0 0.0
      %382 = vmatmul.mubr.f32.gmra.mrb[0].mxu0 %v304
      %v383 = vpop.f32.mrb[0].mxu0
      %v384 = vadd.f32 %v287, %v383
      %v385 = vpop.f32.mrb[0].mxu0
      %386 = vmatprep.mubr.f32.mxu0 0.0
      %387 = vmatmul.mubr.f32.gmra.mrb[0].mxu0 %v307
      %v388 = vpop.f32.mrb[0].mxu0
      %v389 = vadd.f32 %v292, %v388
      %v390 = vpop.f32.mrb[0].mxu0
      %391 = vmatprep.mubr.f32.mxu0 0.0
      %392 = vmatmul.mubr.f32.gmra.mrb[0].mxu0 %v310
      %v393 = vpop.f32.mrb[0].mxu0
      %v394 = vadd.f32 %v297, %v393
      %v395 = vpop.f32.mrb[0].mxu0
      %396 = vdwg.mxu0
      %v397 = vxor.u32 %v379, 2147483648
      %v398 = vxor.u32 %v384, 2147483648
      %v399 = vxor.u32 %v389, 2147483648
      %v400 = vxor.u32 %v394, 2147483648
      %v401 = vmul.f32 %v397, 1.442695
      %v402 = vpow.pop %v401
      %v403 = vmul.f32 %v398, 1.442695
      %v404 = vpow.pop %v403
      %v405 = vmul.f32 %v399, 1.442695
      %v406 = vpow.pop %v405
      %v407 = vmul.f32 %v400, 1.442695
      %v408 = vpow.pop %v407
      %v409 = vadd.f32 %v402, 1.0
      %v410 = vadd.f32 %v404, 1.0
      %v411 = vadd.f32 %v406, 1.0
      %v412 = vadd.f32 %v408, 1.0
      %v413 = vrcp.pop %v409
      %v414 = vmul.f32 1.0, %v413
      %v415 = vrcp.pop %v410
      %v416 = vmul.f32 1.0, %v415
      %v417 = vrcp.pop %v411
      %v418 = vmul.f32 1.0, %v417
      %v419 = vrcp.pop %v412
      %v420 = vmul.f32 1.0, %v419
      %v421 = vmul.f32 %v379, %v414
      %v422 = vmul.f32 %v384, %v416
      %v423 = vmul.f32 %v389, %v418
      %v424 = vmul.f32 %v394, %v420
      %425 = vst.msk [vmem:[%s217] sm:$0xff] %vm222, %v421
      %426 = vst.msk [vmem:[%s217 + $0x8] sm:$0xff] %vm222, %v422
      %427 = vst.msk [vmem:[%s217 + $0x10] sm:$0xff] %vm222, %v423
      %428 = vst.msk [vmem:[%s217 + $0x18] sm:$0xff] %vm222, %v424
      %p429 = scmp.lt.s32.totalorder %s15, 1
      %s430 = scalar_select %p429, %s15, 1
      %s431 = smul.addr %s430, 4
      %s432 = smul.addr %s431, 8
      %s433 = scalar_lea.vmem %s4, %s432
      // Predicated region
      $region37: #{downsample_noise_level_fused.1} parent=35 // pred_check
        %p434 = pneg %p127
      $region38: #{downsample_noise_level_fused.1} parent=35 // pred_check_branch
        %436 = sbr.rel (%p434) target = $region40
      $region39: #{downsample_noise_level_fused.1} parent=35 // pred_region
        _
      $region40: #{downsample_noise_level_fused.1} parent=35 // pred_fallthru
        _
    $region36: #{downsample_noise_level_fused.1} parent=5 // pred_fallthru
      _
    %p437 = scmp.le.s32.totalorder 2, %s10
    // Predicated region
    $region41: #{downsample_noise_level_fused.1} parent=5 // pred_check
      %p438 = pneg %p437
    $region42: #{downsample_noise_level_fused.1} parent=5 // pred_check_branch
      %440 = sbr.rel (%p438) target = $region44
    $region43: #{downsample_noise_level_fused.1} parent=5 // pred_region
      %s441 = ssub.s32 %s10, 2
      // Predicated region
      $region45: #{downsample_noise_level_fused.1} parent=43 // pred_check
        %p442 = pneg %p133
      $region46: #{downsample_noise_level_fused.1} parent=43 // pred_check_branch
        %444 = sbr.rel (%p442) target = $region48
      $region47: #{downsample_noise_level_fused.1} parent=43 // pred_region
        %p445 = scmp.lt.s32.totalorder %s16, 1
        %s446 = scalar_select %p445, %s16, 1
        %s447 = smul.addr %s446, 4
        %s448 = smul.addr %s447, 8
        %s449 = scalar_lea.vmem %s4, %s448
      $region48: #{downsample_noise_level_fused.1} parent=43 // pred_fallthru
        _
    $region44: #{downsample_noise_level_fused.1} parent=5 // pred_fallthru
      _
  $region6: #{downsample_noise_level_fused.1} parent=0 // loop_footer
    %s14 = sadd.s32 1, %s10
  $region7: #{downsample_noise_level_fused.1} parent=0 // loop_footer_branch
    %9 = sbr.rel target = $region3
  $region8: #{downsample_noise_level_fused.1} parent=0 // loop_exit
    _

</llo_original>
